<compile_context>
chip_gen: v5e
topology: v5e:2x2
jax: 0.10.0
libtpu: 0.0.40
codegen_flags: <defaults>
</compile_context>

<pallas_src>
import functools
import math

import jax
import jax.numpy as jnp
from jax import lax
from jax.experimental import pallas as pl
from jax.experimental.pallas import tpu as pltpu


def _label_smoothing_kernel(x_ref, tgt_ref, o_ref, *, padding_idx,
                            confidence, low, log_conf, log_low):
    # x_ref: (block_rows, V) log-probabilities; tgt_ref: (block_rows, 1) int32
    x = x_ref[...].astype(jnp.float32)
    tgt = tgt_ref[...]
    br, v = x.shape

    col = lax.broadcasted_iota(jnp.int32, (br, v), 1)
    is_target = col == tgt                      # scatter_(1, target, confidence)
    is_pad_col = col == padding_idx             # true_dist[:, padding_idx] = 0
    row_is_pad = tgt == padding_idx             # index_fill_(0, pad rows, 0)

    td = jnp.where(is_target, jnp.float32(confidence), jnp.float32(low))
    log_td = jnp.where(is_target, jnp.float32(log_conf), jnp.float32(log_low))
    td = jnp.where(is_pad_col | row_is_pad, jnp.float32(0.0), td)

    # KLDiv pointwise term; defined as 0 where true_dist == 0 (matches torch).
    contrib = jnp.where(td > 0.0, td * (log_td - x), jnp.float32(0.0))
    o_ref[...] = jnp.sum(contrib, axis=-1, keepdims=True).astype(o_ref.dtype)


def _pick_block_rows(rows, vocab, *, vmem_budget_bytes=24 * 1024 * 1024):
    # Budget: double-buffered x tile (2x) plus a few f32 temporaries (~4x) of
    # block_rows * vocab * 4 bytes.  Conservative -> fits v5e/v6e/v7x.
    bytes_per_row = vocab * 4 * 6
    br = vmem_budget_bytes // max(bytes_per_row, 1)
    br = max(8, min(br, 1024))                  # large tiles amortize step cost
    br = (br // 8) * 8                          # sublane-aligned
    rows_rounded = max(8, ((rows + 7) // 8) * 8)
    return min(br, rows_rounded)


def label_smoothing_loss(x, target, *, size, padding_idx, smoothing=0.0,
                         block_rows=None):
    """KLDivLoss(reduction='sum')(x, label_smoothed(target)). x: (N, size) log-probs."""
    n, v = x.shape
    assert v == size, "x.shape[1] must equal size"

    confidence = 1.0 - smoothing
    low = smoothing / (size - 2)
    log_conf = math.log(confidence) if confidence > 0.0 else 0.0
    log_low = math.log(low) if low > 0.0 else 0.0

    if block_rows is None:
        block_rows = _pick_block_rows(n, v)
    grid = pl.cdiv(n, block_rows)               # no host-side pad; edge block masked

    tgt2d = target.astype(jnp.int32).reshape(n, 1)

    kernel = functools.partial(
        _label_smoothing_kernel,
        padding_idx=padding_idx, confidence=confidence, low=low,
        log_conf=log_conf, log_low=log_low)

    row_losses = pl.pallas_call(
        kernel,
        out_shape=jax.ShapeDtypeStruct((n, 1), jnp.float32),
        grid_spec=pltpu.PrefetchScalarGridSpec(
            num_scalar_prefetch=0,
            grid=(grid,),
            in_specs=[
                pl.BlockSpec((block_rows, v), lambda i: (i, 0)),
                pl.BlockSpec((block_rows, 1), lambda i: (i, 0)),
            ],
            out_specs=pl.BlockSpec((block_rows, 1), lambda i: (i, 0)),
        ),
        compiler_params=pltpu.CompilerParams(
            dimension_semantics=("parallel",),
            vmem_limit_bytes=48 * 1024 * 1024,   # headroom on v7x (64 MiB phys)
        ),
    )(x, tgt2d)

    # Scalar reduction outside the kernel: O(N) bytes, negligible vs. N*V read.
    return jnp.sum(row_losses)


def _reference_label_smoothing(x, target, size, padding_idx, smoothing):
    confidence = 1.0 - smoothing
    low = smoothing / (size - 2)
    td = jnp.full(x.shape, low, dtype=jnp.float32)
    td = td.at[jnp.arange(x.shape[0]), target].set(confidence)
    td = td.at[:, padding_idx].set(0.0)
    td = jnp.where((target == padding_idx)[:, None], 0.0, td)
    pointwise = jnp.where(td > 0.0, td * (jnp.log(jnp.where(td > 0, td, 1.0)) - x), 0.0)
    return jnp.sum(pointwise)


if __name__ == "__main__":
    # Small shapes consistent with the module: rows = batch*seq = 2*8 = 16,
    # vocab (size) = 32, padding_idx = 0, smoothing = 0.1.
    n_rows, size, padding_idx, smoothing = 16, 32, 0, 0.1

    key = jax.random.PRNGKey(0)
    k_logits, k_tgt = jax.random.split(key)
    logits = jax.random.normal(k_logits, (n_rows, size), dtype=jnp.float32)
    x = jax.nn.log_softmax(logits, axis=-1)          # KLDivLoss expects log-probs
    target = jax.random.randint(k_tgt, (n_rows,), 0, size, dtype=jnp.int32)
    target = target.at[3].set(padding_idx)           # exercise padded-row path
    target = target.at[11].set(padding_idx)

    loss = label_smoothing_loss(x, target, size=size, padding_idx=padding_idx,
                                smoothing=smoothing)
    jax.block_until_ready(loss)

    ref = _reference_label_smoothing(x, target, size, padding_idx, smoothing)
    assert jnp.allclose(loss, ref, atol=1e-5, rtol=1e-5), (loss, ref)

    # TODO(synk): the PyTorch module also caches `self.true_dist` as a side
    # effect; the kernel synthesizes it on the fly and does not materialize it.
    print("KERNEL_OK")
</pallas_src>

<mosaic_0001>
module attributes {stable_mosaic.version = 11 : i64} {
  func.func @_label_smoothing_kernel(%arg0: i32, %arg1: memref<16x32xf32, #tpu.memory_space<vmem>>, %arg2: memref<16x1xi32, #tpu.memory_space<vmem>>, %arg3: memref<16x1xf32, #tpu.memory_space<vmem>>) attributes {dimension_semantics = [#tpu.dimension_semantics<parallel>], iteration_bounds = array<i64: 1>, scalar_prefetch = 0 : i64, scratch_operands = 0 : i64, tpu.core_type = #tpu.core_type<tc>, window_params = [{transform_indices = @transform_0, window_bounds = array<i64: 16, 32>}, {transform_indices = @transform_1, window_bounds = array<i64: 16, 1>}, {transform_indices = @transform_2, window_bounds = array<i64: 16, 1>}]} {
    %c0 = arith.constant 0 : index
    %c0_0 = arith.constant 0 : index
    %0 = vector.load %arg1[%c0, %c0_0] : memref<16x32xf32, #tpu.memory_space<vmem>>, vector<16x32xf32>
    %c0_1 = arith.constant 0 : index
    %c0_2 = arith.constant 0 : index
    %1 = vector.load %arg2[%c0_1, %c0_2] : memref<16x1xi32, #tpu.memory_space<vmem>>, vector<16x1xi32>
    %2 = tpu.iota {dimensions = array<i32: 1>} : vector<16x32xi32>
    %3 = vector.broadcast %1 : vector<16x1xi32> to vector<16x32xi32>
    %4 = arith.cmpi eq, %2, %3 : vector<16x32xi32>
    %c0_i32 = arith.constant 0 : i32
    %5 = vector.broadcast %c0_i32 : i32 to vector<16x32xi32>
    %6 = arith.cmpi eq, %2, %5 : vector<16x32xi32>
    %c0_i32_3 = arith.constant 0 : i32
    %7 = vector.broadcast %c0_i32_3 : i32 to vector<16x1xi32>
    %8 = arith.cmpi eq, %1, %7 : vector<16x1xi32>
    %cst = arith.constant 0.899999976 : f32
    %cst_4 = arith.constant 0.00333333341 : f32
    %9 = vector.broadcast %cst : f32 to vector<16x32xf32>
    %10 = vector.broadcast %cst_4 : f32 to vector<16x32xf32>
    %11 = arith.select %4, %9, %10 : vector<16x32xi1>, vector<16x32xf32>
    %cst_5 = arith.constant -0.105360515 : f32
    %cst_6 = arith.constant -5.70378256 : f32
    %12 = vector.broadcast %cst_5 : f32 to vector<16x32xf32>
    %13 = vector.broadcast %cst_6 : f32 to vector<16x32xf32>
    %14 = arith.select %4, %12, %13 : vector<16x32xi1>, vector<16x32xf32>
    %15 = vector.broadcast %8 : vector<16x1xi1> to vector<16x32xi1>
    %16 = arith.ori %6, %15 : vector<16x32xi1>
    %cst_7 = arith.constant 0.000000e+00 : f32
    %17 = vector.broadcast %cst_7 : f32 to vector<16x32xf32>
    %18 = arith.select %16, %17, %11 : vector<16x32xi1>, vector<16x32xf32>
    %cst_8 = arith.constant 0.000000e+00 : f32
    %19 = vector.broadcast %cst_8 : f32 to vector<16x32xf32>
    %20 = arith.cmpf ogt, %18, %19 : vector<16x32xf32>
    %21 = arith.subf %14, %0 : vector<16x32xf32>
    %22 = arith.mulf %18, %21 : vector<16x32xf32>
    %cst_9 = arith.constant 0.000000e+00 : f32
    %23 = vector.broadcast %cst_9 : f32 to vector<16x32xf32>
    %24 = arith.select %20, %22, %23 : vector<16x32xi1>, vector<16x32xf32>
    %cst_10 = arith.constant dense<0.000000e+00> : vector<16xf32>
    %25 = vector.multi_reduction <add>, %24, %cst_10 [1] : vector<16x32xf32> to vector<16xf32>
    %26 = vector.shape_cast %25 : vector<16xf32> to vector<16x1xf32>
    %c0_11 = arith.constant 0 : index
    %c0_12 = arith.constant 0 : index
    %27 = vector.load %arg3[%c0_11, %c0_12] : memref<16x1xf32, #tpu.memory_space<vmem>>, vector<16x1xf32>
    tpu.vector_store %arg3[%c0_11, %c0_12], %26 {strides = array<i32>} : memref<16x1xf32, #tpu.memory_space<vmem>>, vector<16x1xf32>,
    return
  }
  func.func @transform_0(%arg0: i32) -> (i32, i32) {
    %c0_i32 = arith.constant 0 : i32
    %c0_i32_0 = arith.constant 0 : i32
    return %arg0, %c0_i32 : i32, i32
  }
  func.func @transform_1(%arg0: i32) -> (i32, i32) {
    %c0_i32 = arith.constant 0 : i32
    %c0_i32_0 = arith.constant 0 : i32
    return %arg0, %c0_i32 : i32, i32
  }
  func.func @transform_2(%arg0: i32) -> (i32, i32) {
    %c0_i32 = arith.constant 0 : i32
    %c0_i32_0 = arith.constant 0 : i32
    return %arg0, %c0_i32 : i32, i32
  }
}

</mosaic_0001>

<llo_original>
// kernel: tpu_custom_call.1
$region0: #{tpu_custom_call.1}
  #allocation0 [shape = 'u32[]', space=smem, size = 0x4, offset = 0x4, fixed_abs, tag = 'smem constant byte address 0x4 - core index']
  #allocation1 [shape = 'u32[72,128]{1,0:T(1,128)}', space=vmem, size = 0x9000, scoped, tag = 'internal scratch']
  %s0 = inlined_call_operand.vmem [shape: f32[16,32], index: 0, kind: input, shape index: {}]
  %s1 = inlined_call_operand.vmem [shape: s32[16,1], index: 1, kind: input, shape index: {}]
  %s2 = inlined_call_operand.vmem [shape: f32[16,1], index: 2, kind: output, shape index: {}]
  %s3 = sld [smem:[#allocation0]]
  $region18: #{tpu_custom_call.1} parent=0
    _
  %s5 = ssub.s32 1, %s3
  %s6 = scalar_select 0, %s5, %s3
  // Predicated region
  $region2: #{tpu_custom_call.1} parent=0 // pred_check
    _
  $region3: #{tpu_custom_call.1} parent=0 // pred_check_branch
    %8 = sbr.rel (0) target = $region5
  $region4: #{tpu_custom_call.1} parent=0 // pred_region
    _
  $region5: #{tpu_custom_call.1} parent=0 // pred_fallthru
    _
  // Predicated region
  $region6: #{tpu_custom_call.1} parent=0 // pred_check
    _
  $region7: #{tpu_custom_call.1} parent=0 // pred_check_branch
    %10 = sbr.rel (0) target = $region9
  $region8: #{tpu_custom_call.1} parent=0 // pred_region
    _
  $region9: #{tpu_custom_call.1} parent=0 // pred_fallthru
    _
  %v11 = vld [vmem:[%s0] sm:$0xff]
  %v12 = vld [vmem:[%s0 + $0x8] sm:$0xff]
  %v13 = vld [vmem:[%s1] sm:$0xff]
  %v14 = vld [vmem:[%s1 + $0x8] sm:$0xff]
  %v15 = vlaneseq
  %v16 = vand.u32 %v15, 127
  %17 = vset.pattern.permute.xlu0 0
  %18 = vperm.xlu0 %17, %v13
  %v19 = vpop.permute.xlu0 %18
  %20 = vset.pattern.permute.xlu0 0
  %21 = vperm.xlu0 %20, %v14
  %v22 = vpop.permute.xlu0 %21
  %vm23 = vcmp.eq.s32.totalorder %v16, %v19
  %vm24 = vcmp.eq.s32.totalorder %v16, %v22
  %vm25 = vcmp.eq.s32.totalorder %v16, 0
  %vm26 = vcmp.eq.s32.totalorder %v13, 0
  %vm27 = vcmp.eq.s32.totalorder %v14, 0
  %v28 = vsel %vm23, 0.9, 0.0033333334
  %v29 = vsel %vm24, 0.9, 0.0033333334
  %v30 = vsel %vm23, -0.105360515, -5.7037826
  %v31 = vsel %vm24, -0.105360515, -5.7037826
  %v32 = vsel %vm26, 1, 0
  %v33 = vsel %vm27, 1, 0
  %34 = vset.pattern.permute.xlu0 0
  %35 = vperm.xlu0 %34, %v32
  %v36 = vpop.permute.xlu0 %35
  %37 = vset.pattern.permute.xlu0 0
  %38 = vperm.xlu0 %37, %v33
  %v39 = vpop.permute.xlu0 %38
  %vm40 = vcmp.eq.s32.totalorder %v36, 1
  %vm41 = vcmp.eq.s32.totalorder %v39, 1
  %vm42 = vmor %vm25, %vm40
  %vm43 = vmor %vm25, %vm41
  %v44 = vsel %vm42, 0.0, %v28
  %v45 = vsel %vm43, 0.0, %v29
  %vm46 = vcmp.gt.f32.partialorder %v44, 0.0
  %vm47 = vcmp.gt.f32.partialorder %v45, 0.0
  %v48 = vsub.f32 %v30, %v11
  %v49 = vsub.f32 %v31, %v12
  %v50 = vmul.f32 %v44, %v48
  %v51 = vmul.f32 %v45, %v49
  %v52 = vsel %vm46, %v50, 0.0
  %v53 = vsel %vm47, %v51, 0.0
  %vm54 = vcmask 261120
  %v55 = vsel %vm54, %v52, 0.0
  %56 = vadd.xlane.f32.xlu0 %v55
  %v57 = vpop.xlane.xlu0 %56
  %v58 = vsel %vm54, %v53, 0.0
  %59 = vadd.xlane.f32.xlu0 %v58
  %v60 = vpop.xlane.xlu0 %59
  %vm61 = vcmask 7168
  %62 = vst.msk [vmem:[%s2] sm:$0xff] %vm61, %v57
  %63 = vst.msk [vmem:[%s2 + $0x8] sm:$0xff] %vm61, %v60
  // Predicated region
  $region10: #{tpu_custom_call.1} parent=0 // pred_check
    _
  $region11: #{tpu_custom_call.1} parent=0 // pred_check_branch
    %65 = sbr.rel (0) target = $region13
  $region12: #{tpu_custom_call.1} parent=0 // pred_region
    _
  $region13: #{tpu_custom_call.1} parent=0 // pred_fallthru
    _
  // Predicated region
  $region14: #{tpu_custom_call.1} parent=0 // pred_check
    _
  $region15: #{tpu_custom_call.1} parent=0 // pred_check_branch
    %67 = sbr.rel (0) target = $region17
  $region16: #{tpu_custom_call.1} parent=0 // pred_region
    _
  $region17: #{tpu_custom_call.1} parent=0 // pred_fallthru
    _

</llo_original>
